<compile_context>
chip_gen: v6e
topology: v6e:2x2x1
jax: 0.10.0
libtpu: 0.0.40
codegen_flags: <defaults>
</compile_context>

<pallas_src>
import functools

import jax
import jax.numpy as jnp
from jax.experimental import pallas as pl
from jax.experimental.pallas import tpu as pltpu

VSPEC = pl.BlockSpec(memory_space=pltpu.MemorySpace.VMEM)

# dot_general dimension numbers for A [M, K] x B [N, K] -> [M, N] (RHS transposed).
NT_DIMS = (((1,), (1,)), ((), ()))


# ---------------- Fused kernel ----------------

def _gat_bn_block(x_bf, adj_hn, wcat_bf, asrc_bf, bd_mask, bias, bn_scale, bn_shift,
                  num_heads, hd):
    """GATConv(heads=H, concat=True) + bias -> ReLU -> BatchNorm(eval), all heads fused.

    x_bf     [N, K]        bf16 node features (K == hd; zero padded for layer 1)
    adj_hn   [N, H*N]      bf16 0/1 adjacency (self loops included), tiled per head
    wcat_bf  [K, hd+H*N]   bf16 [ W | W @ dst-attention expansion ]
    asrc_bf  [1, hd]       bf16 flattened per-head a_src vectors
    bd_mask  [H*N, hd]     bf16 block-diagonal 0/1 head mask
    bias / bn_scale / bn_shift : [1, hd] f32
    """
    # One MXU call yields both W x and the destination attention terms a_dst.(W x_i),
    # already replicated across every source lane of their head block.
    big = jnp.dot(x_bf, wcat_bf, preferred_element_type=jnp.float32)    # [N, hd + H*N]
    wx = big[:, :hd]                                                    # [N, hd]
    e_dst = big[:, hd:]                                                 # [N, H*N]
    wx_bf = wx.astype(jnp.bfloat16)

    # Block-diagonal value matrix: row h*N+j holds (W x_j) restricted to head h.
    # (sublane concat at bf16-tile-aligned offsets, then static 0/1 mask)
    v_bd = jnp.concatenate([wx_bf] * num_heads, axis=0) * bd_mask       # [H*N, hd]

    # Source attention terms a_src.(W x_j) for every head, laid out along lanes:
    # one transposed-RHS matvec against the block-diagonal value matrix.
    e_src = jax.lax.dot_general(asrc_bf, v_bd, NT_DIMS,
                                preferred_element_type=jnp.float32)     # [1, H*N]

    e = e_dst + e_src                                                   # e[i, h*N+j]
    e = jnp.maximum(e, 0.2 * e)                                         # LeakyReLU(0.2)
    m = jnp.max(e, axis=-1, keepdims=True)                              # >= every kept logit
    p = jnp.exp(e - m) * adj_hn                                         # multiplicative mask only
    p_bf = p.astype(jnp.bfloat16)
    # TODO(synk): GATConv attention dropout (p=0.2) is a no-op in eval mode.

    # attention @ values (all heads in one wide matmul) and per-head softmax
    # denominators, already replicated to [N, hd].
    u = jnp.dot(p_bf, v_bd, preferred_element_type=jnp.float32)         # [N, hd]
    denom = jnp.dot(p_bf, bd_mask, preferred_element_type=jnp.float32)  # [N, hd]
    denom = jnp.maximum(denom, 1e-12)                                   # guard empty rows

    y = u * pl.reciprocal(denom, approx=True) + bias
    y = jnp.maximum(y, 0.0)                                             # ReLU
    return y * bn_scale + bn_shift                                      # folded eval BatchNorm


def gnn_kernel(x_ref, adj_ref, pool_ref, wcat_ref, asrc_ref, bdmask_ref,
               lin1_w_ref, lin2_w_ref, vecs_ref, out_ref,
               *, num_heads, hd, out_dim, c_pad):
    adj_hn = adj_ref[...]             # [N, H*N] bf16
    bd_mask = bdmask_ref[...]         # [H*N, hd] bf16
    asrc = asrc_ref[...]              # [2, hd] bf16
    vecs = vecs_ref[...]              # [8, W] f32 packed vector params

    h1 = _gat_bn_block(x_ref[...], adj_hn, wcat_ref[0], asrc[0:1, :], bd_mask,
                       vecs[0:1, :hd], vecs[1:2, :hd], vecs[2:3, :hd],
                       num_heads, hd)
    h2 = _gat_bn_block(h1.astype(jnp.bfloat16), adj_hn, wcat_ref[1], asrc[1:2, :], bd_mask,
                       vecs[3:4, :hd], vecs[4:5, :hd], vecs[5:6, :hd],
                       num_heads, hd)

    # global_mean_pool as a matmul, then Linear -> ReLU -> (Dropout=id) -> Linear.
    pooled = jnp.dot(pool_ref[...], h2.astype(jnp.bfloat16),
                     preferred_element_type=jnp.float32)                # [B_pad, hd]
    z = jnp.dot(pooled.astype(jnp.bfloat16), lin1_w_ref[...],
                preferred_element_type=jnp.float32) + vecs[6:7, :out_dim]
    z = jnp.maximum(z, 0.0)
    # TODO(synk): nn.Dropout(0.5) is identity in eval mode; training-mode RNG dropout omitted.
    out_ref[...] = (jnp.dot(z.astype(jnp.bfloat16), lin2_w_ref[...],
                            preferred_element_type=jnp.float32)
                    + vecs[7:8, :c_pad]).astype(out_ref.dtype)


# ---------------- Host-side preparation (done ONCE, out of the forward path) ----------------

def _fold_bn(gamma, beta, mean, var, eps=1e-5):
    scale = gamma * jax.lax.rsqrt(var + eps)
    return scale, beta - mean * scale


def prepare_gnn_inputs(x, adj, pool, params, *, num_heads, num_classes):
    """One-time host-side preprocessing: padding, bf16 casts, BN folding, stacking."""
    f32, bf16 = jnp.float32, jnp.bfloat16
    n, input_dim = x.shape
    b = pool.shape[0]
    hd = params["w1"].shape[1]                    # hidden_dim * num_heads
    d = hd // num_heads
    out_dim = params["lin1_w"].shape[1]
    # TODO(synk): handle input_dim > hidden_dim*num_heads (needs an unstacked first weight block).
    assert input_dim <= hd
    b_pad = ((b + 7) // 8) * 8                    # sublane-dense output rows
    c_pad = ((num_classes + 127) // 128) * 128    # lane-dense output columns

    def fold_wcat(w, adst):
        # [ W | W @ dst-expansion ]: column h*N+j of the right block equals
        # W[:, h*D:(h+1)*D] @ adst[h], so the big in-kernel matmul emits a_dst
        # already replicated across the source lanes of its head.
        cols = jnp.stack([w[:, h * d:(h + 1) * d] @ adst[h] for h in range(num_heads)],
                         axis=1)                                            # [K, H]
        return jnp.concatenate([w, jnp.repeat(cols, n, axis=1)], axis=1)    # [K, hd+H*N]

    w1p = jnp.zeros((hd, hd), f32).at[:input_dim].set(params["w1"])
    wcat_stack = jnp.stack([fold_wcat(w1p, params["adst1"]),
                            fold_wcat(params["w2"], params["adst2"])])      # [2, hd, hd+H*N]
    asrc = jnp.stack([params["asrc1"].reshape(-1),
                      params["asrc2"].reshape(-1)])                         # [2, hd]
    bd_mask = jnp.kron(jnp.eye(num_heads, dtype=f32), jnp.ones((n, d), f32))  # [H*N, hd]

    bn1_s, bn1_t = _fold_bn(params["bn1_g"], params["bn1_b"], params["bn1_m"], params["bn1_v"])
    bn2_s, bn2_t = _fold_bn(params["bn2_g"], params["bn2_b"], params["bn2_m"], params["bn2_v"])

    vec_w = max(hd, out_dim, c_pad)
    vecs = jnp.zeros((8, vec_w), f32)
    vecs = vecs.at[0, :hd].set(params["b1"].reshape(-1))
    vecs = vecs.at[1, :hd].set(bn1_s.reshape(-1))
    vecs = vecs.at[2, :hd].set(bn1_t.reshape(-1))
    vecs = vecs.at[3, :hd].set(params["b2"].reshape(-1))
    vecs = vecs.at[4, :hd].set(bn2_s.reshape(-1))
    vecs = vecs.at[5, :hd].set(bn2_t.reshape(-1))
    vecs = vecs.at[6, :out_dim].set(params["lin1_b"].reshape(-1))
    vecs = vecs.at[7, :num_classes].set(params["lin2_b"].reshape(-1))

    x_p = jnp.zeros((n, hd), f32).at[:, :input_dim].set(x)
    adj_hn = jnp.tile(adj, (1, num_heads))                                  # [N, H*N]
    pool_p = jnp.zeros((b_pad, n), f32).at[:b].set(pool)
    lin2_wp = jnp.zeros((out_dim, c_pad), f32).at[:, :num_classes].set(params["lin2_w"])

    inputs = (x_p.astype(bf16), adj_hn.astype(bf16), pool_p.astype(bf16),
              wcat_stack.astype(bf16), asrc.astype(bf16), bd_mask.astype(bf16),
              params["lin1_w"].astype(bf16), lin2_wp.astype(bf16), vecs)
    meta = dict(num_heads=num_heads, hd=hd, out_dim=out_dim,
                num_classes=num_classes, b=b, b_pad=b_pad, c_pad=c_pad)
    return inputs, meta


def advanced_gnn_forward(inputs, meta):
    """Per-call forward path: one fused pallas_call, nothing else."""
    kernel = functools.partial(gnn_kernel, num_heads=meta["num_heads"], hd=meta["hd"],
                               out_dim=meta["out_dim"], c_pad=meta["c_pad"])
    out = pl.pallas_call(
        kernel,
        out_shape=jax.ShapeDtypeStruct((meta["b_pad"], meta["c_pad"]), jnp.float32),
        in_specs=[VSPEC] * len(inputs),
        out_specs=VSPEC,
    )(*inputs)
    return out[:meta["b"], :meta["num_classes"]]


# ---------------- Deterministic setup ----------------

def make_params(key, input_dim, hidden_dim, output_dim, num_classes, num_heads):
    HD = hidden_dim * num_heads
    ks = jax.random.split(key, 16)
    f32 = jnp.float32

    def glorot(k, shape):
        fan_in, fan_out = shape[0], shape[-1]
        scale = jnp.sqrt(2.0 / (fan_in + fan_out))
        return jax.random.normal(k, shape, f32) * scale

    return dict(
        # GATConv 1
        w1=glorot(ks[0], (input_dim, HD)),
        asrc1=glorot(ks[1], (num_heads, hidden_dim)),
        adst1=glorot(ks[2], (num_heads, hidden_dim)),
        b1=jnp.zeros((1, HD), f32),
        bn1_g=1.0 + 0.1 * jax.random.normal(ks[3], (1, HD), f32),
        bn1_b=0.1 * jax.random.normal(ks[4], (1, HD), f32),
        bn1_m=0.1 * jax.random.normal(ks[5], (1, HD), f32),
        bn1_v=0.5 + jax.random.uniform(ks[6], (1, HD), f32),
        # GATConv 2
        w2=glorot(ks[7], (HD, HD)),
        asrc2=glorot(ks[8], (num_heads, hidden_dim)),
        adst2=glorot(ks[9], (num_heads, hidden_dim)),
        b2=jnp.zeros((1, HD), f32),
        bn2_g=1.0 + 0.1 * jax.random.normal(ks[10], (1, HD), f32),
        bn2_b=0.1 * jax.random.normal(ks[11], (1, HD), f32),
        bn2_m=0.1 * jax.random.normal(ks[12], (1, HD), f32),
        bn2_v=0.5 + jax.random.uniform(ks[13], (1, HD), f32),
        # MLP head
        lin1_w=glorot(ks[14], (HD, output_dim)),
        lin1_b=jnp.zeros((1, output_dim), f32),
        lin2_w=glorot(ks[15], (output_dim, num_classes)),
        lin2_b=jnp.zeros((1, num_classes), f32),
    )


if __name__ == "__main__":
    # Small graph batch: 2 graphs x 8 nodes (ring topology, bidirectional edges).
    N_PER, B = 8, 2
    N = N_PER * B
    INPUT_DIM, HIDDEN_DIM, OUTPUT_DIM, NUM_CLASSES, NUM_HEADS = 8, 8, 16, 6, 4

    key = jax.random.PRNGKey(0)
    k_x, k_p = jax.random.split(key)

    # node features
    x = jax.random.normal(k_x, (N, INPUT_DIM), jnp.float32)

    # edge_index (PyG convention: row 0 = src, row 1 = dst), ring per graph both ways
    src, dst = [], []
    for g in range(B):
        off = g * N_PER
        for i in range(N_PER):
            j = (i + 1) % N_PER
            src += [off + i, off + j]
            dst += [off + j, off + i]
    edge_index = jnp.array([src, dst], dtype=jnp.int32)   # [2, 32]
    batch = jnp.array([g for g in range(B) for _ in range(N_PER)], dtype=jnp.int32)

    # dense adjacency mask adj[dst, src] with self loops (GATConv add_self_loops=True)
    adj = jnp.zeros((N, N), jnp.float32).at[edge_index[1], edge_index[0]].set(1.0)
    adj = jnp.maximum(adj, jnp.eye(N, dtype=jnp.float32))

    # mean-pool matrix [B, N]
    onehot = (batch[None, :] == jnp.arange(B)[:, None]).astype(jnp.float32)
    pool = onehot / jnp.sum(onehot, axis=1, keepdims=True)

    params = make_params(k_p, INPUT_DIM, HIDDEN_DIM, OUTPUT_DIM, NUM_CLASSES, NUM_HEADS)

    # one-time host prep (hoisted out of the forward path), then the fused kernel
    inputs, meta = prepare_gnn_inputs(x, adj, pool, params,
                                      num_heads=NUM_HEADS, num_classes=NUM_CLASSES)
    out = advanced_gnn_forward(inputs, meta)
    out = jax.block_until_ready(out)
    assert out.shape == (B, NUM_CLASSES)
    print("KERNEL_OK")
</pallas_src>

<mosaic_0001>
module attributes {stable_mosaic.version = 11 : i64} {
  func.func @gnn_kernel(%arg0: memref<16x32xbf16, #tpu.memory_space<vmem>>, %arg1: memref<16x64xbf16, #tpu.memory_space<vmem>>, %arg2: memref<8x16xbf16, #tpu.memory_space<vmem>>, %arg3: memref<2x32x96xbf16, #tpu.memory_space<vmem>>, %arg4: memref<2x32xbf16, #tpu.memory_space<vmem>>, %arg5: memref<64x32xbf16, #tpu.memory_space<vmem>>, %arg6: memref<32x16xbf16, #tpu.memory_space<vmem>>, %arg7: memref<16x128xbf16, #tpu.memory_space<vmem>>, %arg8: memref<8x128xf32, #tpu.memory_space<vmem>>, %arg9: memref<8x128xf32, #tpu.memory_space<vmem>>) attributes {dimension_semantics = [], scalar_prefetch = 0 : i64, scratch_operands = 0 : i64, tpu.core_type = #tpu.core_type<tc>} {
    %c0 = arith.constant 0 : index
    %c0_0 = arith.constant 0 : index
    %0 = vector.load %arg1[%c0, %c0_0] : memref<16x64xbf16, #tpu.memory_space<vmem>>, vector<16x64xbf16>
    %c0_1 = arith.constant 0 : index
    %c0_2 = arith.constant 0 : index
    %1 = vector.load %arg5[%c0_1, %c0_2] : memref<64x32xbf16, #tpu.memory_space<vmem>>, vector<64x32xbf16>
    %c0_3 = arith.constant 0 : index
    %c0_4 = arith.constant 0 : index
    %2 = vector.load %arg4[%c0_3, %c0_4] : memref<2x32xbf16, #tpu.memory_space<vmem>>, vector<2x32xbf16>
    %c0_5 = arith.constant 0 : index
    %c0_6 = arith.constant 0 : index
    %3 = vector.load %arg8[%c0_5, %c0_6] : memref<8x128xf32, #tpu.memory_space<vmem>>, vector<8x128xf32>
    %c0_7 = arith.constant 0 : index
    %c0_8 = arith.constant 0 : index
    %4 = vector.load %arg0[%c0_7, %c0_8] : memref<16x32xbf16, #tpu.memory_space<vmem>>, vector<16x32xbf16>
    %c0_9 = arith.constant 0 : index
    %c0_10 = arith.constant 0 : index
    %c0_11 = arith.constant 0 : index
    %5 = vector.load %arg3[%c0_9, %c0_10, %c0_11] : memref<2x32x96xbf16, #tpu.memory_space<vmem>>, vector<1x32x96xbf16>
    %6 = vector.shape_cast %5 : vector<1x32x96xbf16> to vector<32x96xbf16>
    %7 = vector.extract_strided_slice %2 {offsets = [0, 0], sizes = [1, 32], strides = [1, 1]} : vector<2x32xbf16> to vector<1x32xbf16>
    %8 = vector.extract_strided_slice %3 {offsets = [0, 0], sizes = [1, 32], strides = [1, 1]} : vector<8x128xf32> to vector<1x32xf32>
    %9 = vector.extract_strided_slice %3 {offsets = [1, 0], sizes = [1, 32], strides = [1, 1]} : vector<8x128xf32> to vector<1x32xf32>
    %10 = vector.extract_strided_slice %3 {offsets = [2, 0], sizes = [1, 32], strides = [1, 1]} : vector<8x128xf32> to vector<1x32xf32>
    %cst = arith.constant dense<0.000000e+00> : vector<16x96xf32>
    %11 = tpu.matmul %4, %6, %cst {dimension_numbers = #tpu.dot_dimension_numbers<[1], [0], [0], [1], [0, 0, 1, 1], [], []>} : vector<16x32xbf16>, vector<32x96xbf16>, vector<16x96xf32> -> vector<16x96xf32>
    %12 = vector.extract_strided_slice %11 {offsets = [0, 0], sizes = [16, 32], strides = [1, 1]} : vector<16x96xf32> to vector<16x32xf32>
    %13 = vector.extract_strided_slice %11 {offsets = [0, 32], sizes = [16, 64], strides = [1, 1]} : vector<16x96xf32> to vector<16x64xf32>
    %14 = arith.truncf %12 : vector<16x32xf32> to vector<16x32xbf16>
    %15 = tpu.concatenate %14, %14, %14, %14 in 0 : vector<16x32xbf16>, vector<16x32xbf16>, vector<16x32xbf16>, vector<16x32xbf16> -> vector<64x32xbf16>
    %16 = arith.mulf %15, %1 : vector<64x32xbf16>
    %cst_12 = arith.constant dense<0.000000e+00> : vector<1x64xf32>
    %17 = tpu.matmul %7, %16, %cst_12 {dimension_numbers = #tpu.dot_dimension_numbers<[1], [1], [0], [0], [0, 0, 1, 0], [], []>} : vector<1x32xbf16>, vector<64x32xbf16>, vector<1x64xf32> -> vector<1x64xf32>
    %18 = vector.broadcast %17 : vector<1x64xf32> to vector<16x64xf32>
    %19 = arith.addf %13, %18 : vector<16x64xf32>
    %cst_13 = arith.constant 2.000000e-01 : f32
    %20 = vector.broadcast %cst_13 : f32 to vector<16x64xf32>
    %21 = arith.mulf %20, %19 : vector<16x64xf32>
    %22 = arith.maximumf %19, %21 : vector<16x64xf32>
    %cst_14 = arith.constant dense<0xFF800000> : vector<16xf32>
    %23 = vector.multi_reduction <maximumf>, %22, %cst_14 [1] : vector<16x64xf32> to vector<16xf32>
    %24 = vector.shape_cast %23 : vector<16xf32> to vector<16x1xf32>
    %25 = vector.broadcast %24 : vector<16x1xf32> to vector<16x64xf32>
    %26 = arith.subf %22, %25 : vector<16x64xf32>
    %27 = math.exp %26 : vector<16x64xf32>
    %28 = arith.extf %0 : vector<16x64xbf16> to vector<16x64xf32>
    %29 = arith.mulf %27, %28 : vector<16x64xf32>
    %30 = arith.truncf %29 : vector<16x64xf32> to vector<16x64xbf16>
    %cst_15 = arith.constant dense<0.000000e+00> : vector<16x32xf32>
    %31 = tpu.matmul %30, %16, %cst_15 {dimension_numbers = #tpu.dot_dimension_numbers<[1], [0], [0], [1], [0, 0, 1, 1], [], []>} : vector<16x64xbf16>, vector<64x32xbf16>, vector<16x32xf32> -> vector<16x32xf32>
    %cst_16 = arith.constant dense<0.000000e+00> : vector<16x32xf32>
    %32 = tpu.matmul %30, %1, %cst_16 {dimension_numbers = #tpu.dot_dimension_numbers<[1], [0], [0], [1], [0, 0, 1, 1], [], []>} : vector<16x64xbf16>, vector<64x32xbf16>, vector<16x32xf32> -> vector<16x32xf32>
    %cst_17 = arith.constant 9.99999996E-13 : f32
    %33 = vector.broadcast %cst_17 : f32 to vector<16x32xf32>
    %34 = arith.maximumf %32, %33 : vector<16x32xf32>
    %35 = tpu.reciprocal %34 {approx = true} : vector<16x32xf32> -> vector<16x32xf32>
    %36 = arith.mulf %31, %35 : vector<16x32xf32>
    %37 = vector.broadcast %8 : vector<1x32xf32> to vector<16x32xf32>
    %38 = arith.addf %36, %37 : vector<16x32xf32>
    %cst_18 = arith.constant 0.000000e+00 : f32
    %39 = vector.broadcast %cst_18 : f32 to vector<16x32xf32>
    %40 = arith.maximumf %38, %39 : vector<16x32xf32>
    %41 = vector.broadcast %9 : vector<1x32xf32> to vector<16x32xf32>
    %42 = arith.mulf %40, %41 : vector<16x32xf32>
    %43 = vector.broadcast %10 : vector<1x32xf32> to vector<16x32xf32>
    %44 = arith.addf %42, %43 : vector<16x32xf32>
    %45 = arith.truncf %44 : vector<16x32xf32> to vector<16x32xbf16>
    %c1 = arith.constant 1 : index
    %c0_19 = arith.constant 0 : index
    %c0_20 = arith.constant 0 : index
    %46 = vector.load %arg3[%c1, %c0_19, %c0_20] : memref<2x32x96xbf16, #tpu.memory_space<vmem>>, vector<1x32x96xbf16>
    %47 = vector.shape_cast %46 : vector<1x32x96xbf16> to vector<32x96xbf16>
    %48 = vector.extract_strided_slice %2 {offsets = [1, 0], sizes = [1, 32], strides = [1, 1]} : vector<2x32xbf16> to vector<1x32xbf16>
    %49 = vector.extract_strided_slice %3 {offsets = [3, 0], sizes = [1, 32], strides = [1, 1]} : vector<8x128xf32> to vector<1x32xf32>
    %50 = vector.extract_strided_slice %3 {offsets = [4, 0], sizes = [1, 32], strides = [1, 1]} : vector<8x128xf32> to vector<1x32xf32>
    %51 = vector.extract_strided_slice %3 {offsets = [5, 0], sizes = [1, 32], strides = [1, 1]} : vector<8x128xf32> to vector<1x32xf32>
    %cst_21 = arith.constant dense<0.000000e+00> : vector<16x96xf32>
    %52 = tpu.matmul %45, %47, %cst_21 {dimension_numbers = #tpu.dot_dimension_numbers<[1], [0], [0], [1], [0, 0, 1, 1], [], []>} : vector<16x32xbf16>, vector<32x96xbf16>, vector<16x96xf32> -> vector<16x96xf32>
    %53 = vector.extract_strided_slice %52 {offsets = [0, 0], sizes = [16, 32], strides = [1, 1]} : vector<16x96xf32> to vector<16x32xf32>
    %54 = vector.extract_strided_slice %52 {offsets = [0, 32], sizes = [16, 64], strides = [1, 1]} : vector<16x96xf32> to vector<16x64xf32>
    %55 = arith.truncf %53 : vector<16x32xf32> to vector<16x32xbf16>
    %56 = tpu.concatenate %55, %55, %55, %55 in 0 : vector<16x32xbf16>, vector<16x32xbf16>, vector<16x32xbf16>, vector<16x32xbf16> -> vector<64x32xbf16>
    %57 = arith.mulf %56, %1 : vector<64x32xbf16>
    %cst_22 = arith.constant dense<0.000000e+00> : vector<1x64xf32>
    %58 = tpu.matmul %48, %57, %cst_22 {dimension_numbers = #tpu.dot_dimension_numbers<[1], [1], [0], [0], [0, 0, 1, 0], [], []>} : vector<1x32xbf16>, vector<64x32xbf16>, vector<1x64xf32> -> vector<1x64xf32>
    %59 = vector.broadcast %58 : vector<1x64xf32> to vector<16x64xf32>
    %60 = arith.addf %54, %59 : vector<16x64xf32>
    %cst_23 = arith.constant 2.000000e-01 : f32
    %61 = vector.broadcast %cst_23 : f32 to vector<16x64xf32>
    %62 = arith.mulf %61, %60 : vector<16x64xf32>
    %63 = arith.maximumf %60, %62 : vector<16x64xf32>
    %cst_24 = arith.constant dense<0xFF800000> : vector<16xf32>
    %64 = vector.multi_reduction <maximumf>, %63, %cst_24 [1] : vector<16x64xf32> to vector<16xf32>
    %65 = vector.shape_cast %64 : vector<16xf32> to vector<16x1xf32>
    %66 = vector.broadcast %65 : vector<16x1xf32> to vector<16x64xf32>
    %67 = arith.subf %63, %66 : vector<16x64xf32>
    %68 = math.exp %67 : vector<16x64xf32>
    %69 = arith.extf %0 : vector<16x64xbf16> to vector<16x64xf32>
    %70 = arith.mulf %68, %69 : vector<16x64xf32>
    %71 = arith.truncf %70 : vector<16x64xf32> to vector<16x64xbf16>
    %cst_25 = arith.constant dense<0.000000e+00> : vector<16x32xf32>
    %72 = tpu.matmul %71, %57, %cst_25 {dimension_numbers = #tpu.dot_dimension_numbers<[1], [0], [0], [1], [0, 0, 1, 1], [], []>} : vector<16x64xbf16>, vector<64x32xbf16>, vector<16x32xf32> -> vector<16x32xf32>
    %cst_26 = arith.constant dense<0.000000e+00> : vector<16x32xf32>
    %73 = tpu.matmul %71, %1, %cst_26 {dimension_numbers = #tpu.dot_dimension_numbers<[1], [0], [0], [1], [0, 0, 1, 1], [], []>} : vector<16x64xbf16>, vector<64x32xbf16>, vector<16x32xf32> -> vector<16x32xf32>
    %cst_27 = arith.constant 9.99999996E-13 : f32
    %74 = vector.broadcast %cst_27 : f32 to vector<16x32xf32>
    %75 = arith.maximumf %73, %74 : vector<16x32xf32>
    %76 = tpu.reciprocal %75 {approx = true} : vector<16x32xf32> -> vector<16x32xf32>
    %77 = arith.mulf %72, %76 : vector<16x32xf32>
    %78 = vector.broadcast %49 : vector<1x32xf32> to vector<16x32xf32>
    %79 = arith.addf %77, %78 : vector<16x32xf32>
    %cst_28 = arith.constant 0.000000e+00 : f32
    %80 = vector.broadcast %cst_28 : f32 to vector<16x32xf32>
    %81 = arith.maximumf %79, %80 : vector<16x32xf32>
    %82 = vector.broadcast %50 : vector<1x32xf32> to vector<16x32xf32>
    %83 = arith.mulf %81, %82 : vector<16x32xf32>
    %84 = vector.broadcast %51 : vector<1x32xf32> to vector<16x32xf32>
    %85 = arith.addf %83, %84 : vector<16x32xf32>
    %c0_29 = arith.constant 0 : index
    %c0_30 = arith.constant 0 : index
    %86 = vector.load %arg2[%c0_29, %c0_30] : memref<8x16xbf16, #tpu.memory_space<vmem>>, vector<8x16xbf16>
    %87 = arith.truncf %85 : vector<16x32xf32> to vector<16x32xbf16>
    %cst_31 = arith.constant dense<0.000000e+00> : vector<8x32xf32>
    %88 = tpu.matmul %86, %87, %cst_31 {dimension_numbers = #tpu.dot_dimension_numbers<[1], [0], [0], [1], [0, 0, 1, 1], [], []>} : vector<8x16xbf16>, vector<16x32xbf16>, vector<8x32xf32> -> vector<8x32xf32>
    %89 = arith.truncf %88 : vector<8x32xf32> to vector<8x32xbf16>
    %c0_32 = arith.constant 0 : index
    %c0_33 = arith.constant 0 : index
    %90 = vector.load %arg6[%c0_32, %c0_33] : memref<32x16xbf16, #tpu.memory_space<vmem>>, vector<32x16xbf16>
    %cst_34 = arith.constant dense<0.000000e+00> : vector<8x16xf32>
    %91 = tpu.matmul %89, %90, %cst_34 {dimension_numbers = #tpu.dot_dimension_numbers<[1], [0], [0], [1], [0, 0, 1, 1], [], []>} : vector<8x32xbf16>, vector<32x16xbf16>, vector<8x16xf32> -> vector<8x16xf32>
    %92 = vector.extract_strided_slice %3 {offsets = [6, 0], sizes = [1, 16], strides = [1, 1]} : vector<8x128xf32> to vector<1x16xf32>
    %93 = vector.broadcast %92 : vector<1x16xf32> to vector<8x16xf32>
    %94 = arith.addf %91, %93 : vector<8x16xf32>
    %cst_35 = arith.constant 0.000000e+00 : f32
    %95 = vector.broadcast %cst_35 : f32 to vector<8x16xf32>
    %96 = arith.maximumf %94, %95 : vector<8x16xf32>
    %97 = arith.truncf %96 : vector<8x16xf32> to vector<8x16xbf16>
    %c0_36 = arith.constant 0 : index
    %c0_37 = arith.constant 0 : index
    %98 = vector.load %arg7[%c0_36, %c0_37] : memref<16x128xbf16, #tpu.memory_space<vmem>>, vector<16x128xbf16>
    %cst_38 = arith.constant dense<0.000000e+00> : vector<8x128xf32>
    %99 = tpu.matmul %97, %98, %cst_38 {dimension_numbers = #tpu.dot_dimension_numbers<[1], [0], [0], [1], [0, 0, 1, 1], [], []>} : vector<8x16xbf16>, vector<16x128xbf16>, vector<8x128xf32> -> vector<8x128xf32>
    %100 = vector.extract_strided_slice %3 {offsets = [7, 0], sizes = [1, 128], strides = [1, 1]} : vector<8x128xf32> to vector<1x128xf32>
    %101 = vector.broadcast %100 : vector<1x128xf32> to vector<8x128xf32>
    %102 = arith.addf %99, %101 : vector<8x128xf32>
    %c0_39 = arith.constant 0 : index
    %c0_40 = arith.constant 0 : index
    %103 = vector.load %arg9[%c0_39, %c0_40] : memref<8x128xf32, #tpu.memory_space<vmem>>, vector<8x128xf32>
    tpu.vector_store %arg9[%c0_39, %c0_40], %102 {strides = array<i32>} : memref<8x128xf32, #tpu.memory_space<vmem>>, vector<8x128xf32>,
    return
  }
}

</mosaic_0001>

<llo_original>
// kernel: tpu_custom_call.1
$region0: #{tpu_custom_call.1}
  #allocation0 [shape = 'u32[]', space=smem, size = 0x4, offset = 0x4, fixed_abs, tag = 'smem constant byte address 0x4 - core index']
  #allocation1 [shape = 'u32[144,128]{1,0:T(1,128)}', space=vmem, size = 0x12000, scoped, tag = 'internal scratch']
  %s0 = inlined_call_operand.vmem [shape: bf16[16,32], index: 0, kind: input, shape index: {}]
  %s1 = inlined_call_operand.vmem [shape: bf16[16,64], index: 1, kind: input, shape index: {}]
  %s2 = inlined_call_operand.hbm [shape: bf16[8,16], index: 2, kind: input, shape index: {}]
  %s3 = inlined_call_operand.vmem [shape: bf16[2,32,96], index: 3, kind: input, shape index: {}]
  %s4 = inlined_call_operand.vmem [shape: bf16[2,32], index: 4, kind: input, shape index: {}]
  %s5 = inlined_call_operand.vmem [shape: bf16[64,32], index: 5, kind: input, shape index: {}]
  %s6 = inlined_call_operand.vmem [shape: bf16[32,16], index: 6, kind: input, shape index: {}]
  %s7 = inlined_call_operand.vmem [shape: bf16[16,128], index: 7, kind: input, shape index: {}]
  %s8 = inlined_call_operand.hbm [shape: f32[8,128], index: 8, kind: input, shape index: {}]
  %s9 = inlined_call_operand.hbm [shape: f32[8,128], index: 9, kind: output, shape index: {}]
  %s10 = sld [smem:[#allocation0]]
  $region54: #{tpu_custom_call.1} parent=0
    _
  %s12 = ssub.s32 1, %s10
  %s13 = scalar_select 0, %s12, %s10
  $region1: #{tpu_custom_call.1} parent=0
    #allocation2 [shape = 'u8[2048]{0}', space=vmem, size = 0x800, scoped, tag = 'input window, operand 2, single buffered']
    #allocation3 [shape = 's32[1]{0}', space=sflag, size = 0x4, scoped, tag = 'scoped memory for tpu_custom_call.1']
    #allocation4 [shape = 's32[1]{0}', space=sflag, size = 0x4, scoped, tag = 'scoped memory for tpu_custom_call.1']
    #allocation5 [shape = 'u8[4096]{0}', space=vmem, size = 0x1000, scoped, tag = 'input window, operand 8, single buffered']
    #allocation6 [shape = 's32[1]{0}', space=sflag, size = 0x4, scoped, tag = 'scoped memory for tpu_custom_call.1']
    #allocation7 [shape = 'u8[4096]{0}', space=vmem, size = 0x1000, scoped, tag = 'output window, operand 0, single buffered']
    %14 = vsyncpa [#allocation3], 0
    %15 = vsyncpa [#allocation6], 0
    %16 = vsyncpa [#allocation4], 0
    // Predicated region
    $region2: #{tpu_custom_call.1} parent=1 // pred_check
      _
    $region3: #{tpu_custom_call.1} parent=1 // pred_check_branch
      %18 = sbr.rel (0) target = $region5
    $region4: #{tpu_custom_call.1} parent=1 // pred_region
      _
    $region5: #{tpu_custom_call.1} parent=1 // pred_fallthru
      _
    // Predicated region
    $region6: #{tpu_custom_call.1} parent=1 // pred_check
      _
    $region7: #{tpu_custom_call.1} parent=1 // pred_check_branch
      %20 = sbr.rel (0) target = $region9
    $region8: #{tpu_custom_call.1} parent=1 // pred_region
      _
    $region9: #{tpu_custom_call.1} parent=1 // pred_fallthru
      _
    // Predicated region
    $region10: #{tpu_custom_call.1} parent=1 // pred_check
      _
    $region11: #{tpu_custom_call.1} parent=1 // pred_check_branch
      %22 = sbr.rel (0) target = $region13
    $region12: #{tpu_custom_call.1} parent=1 // pred_region
      %s24 = ssub.s32 64, 64
      %25 = vsyncadd [#allocation3], %s24
      %s27 = sshll.u32 [#allocation2], 4
      %s28 = int_to_ptr.vmem [resolvable:$true] %s27
      %30 = dma.hbm_to_vmem [thread:$0]  %s2, 64, %s28, [#allocation3]
    $region13: #{tpu_custom_call.1} parent=1 // pred_fallthru
      _
    // Predicated region
    $region14: #{tpu_custom_call.1} parent=1 // pred_check
      _
    $region15: #{tpu_custom_call.1} parent=1 // pred_check_branch
      %32 = sbr.rel (0) target = $region17
    $region16: #{tpu_custom_call.1} parent=1 // pred_region
      _
    $region17: #{tpu_custom_call.1} parent=1 // pred_fallthru
      _
    // Predicated region
    $region18: #{tpu_custom_call.1} parent=1 // pred_check
      _
    $region19: #{tpu_custom_call.1} parent=1 // pred_check_branch
      %34 = sbr.rel (0) target = $region21
    $region20: #{tpu_custom_call.1} parent=1 // pred_region
      _
    $region21: #{tpu_custom_call.1} parent=1 // pred_fallthru
      _
    // Predicated region
    $region22: #{tpu_custom_call.1} parent=1 // pred_check
      _
    $region23: #{tpu_custom_call.1} parent=1 // pred_check_branch
      %36 = sbr.rel (0) target = $region25
    $region24: #{tpu_custom_call.1} parent=1 // pred_region
      _
    $region25: #{tpu_custom_call.1} parent=1 // pred_fallthru
      _
    // Predicated region
    $region26: #{tpu_custom_call.1} parent=1 // pred_check
      _
    $region27: #{tpu_custom_call.1} parent=1 // pred_check_branch
      %38 = sbr.rel (0) target = $region29
    $region28: #{tpu_custom_call.1} parent=1 // pred_region
      _
    $region29: #{tpu_custom_call.1} parent=1 // pred_fallthru
      _
    // Predicated region
    $region30: #{tpu_custom_call.1} parent=1 // pred_check
      _
    $region31: #{tpu_custom_call.1} parent=1 // pred_check_branch
      %40 = sbr.rel (0) target = $region33
    $region32: #{tpu_custom_call.1} parent=1 // pred_region
      _
    $region33: #{tpu_custom_call.1} parent=1 // pred_fallthru
      _
    // Predicated region
    $region34: #{tpu_custom_call.1} parent=1 // pred_check
      _
    $region35: #{tpu_custom_call.1} parent=1 // pred_check_branch
      %42 = sbr.rel (0) target = $region37
    $region36: #{tpu_custom_call.1} parent=1 // pred_region
      %s44 = ssub.s32 128, 128
      %45 = vsyncadd [#allocation6], %s44
      %s47 = sshll.u32 [#allocation5], 4
      %s48 = int_to_ptr.vmem [resolvable:$true] %s47
      %50 = dma.hbm_to_vmem [thread:$0]  %s8, 128, %s48, [#allocation6]
    $region37: #{tpu_custom_call.1} parent=1 // pred_fallthru
      _
    // Predicated region
    $region38: #{tpu_custom_call.1} parent=1 // pred_check
      _
    $region39: #{tpu_custom_call.1} parent=1 // pred_check_branch
      %52 = sbr.rel (0) target = $region41
    $region40: #{tpu_custom_call.1} parent=1 // pred_region
      %53 = dma.done [#allocation3], 64
    $region41: #{tpu_custom_call.1} parent=1 // pred_fallthru
      _
    // Predicated region
    $region42: #{tpu_custom_call.1} parent=1 // pred_check
      _
    $region43: #{tpu_custom_call.1} parent=1 // pred_check_branch
      %55 = sbr.rel (0) target = $region45
    $region44: #{tpu_custom_call.1} parent=1 // pred_region
      %56 = dma.done [#allocation6], 128
    $region45: #{tpu_custom_call.1} parent=1 // pred_fallthru
      _
    %v58 = vld [vmem:[%s1] sm:$0xf]
    %v59 = vld [vmem:[%s1 + $0x4] sm:$0xf]
    %v60 = vld [vmem:[%s5] sm:$0xf]
    %v61 = vld [vmem:[%s5 + $0x4] sm:$0xf]
    %v62 = vld [vmem:[%s5 + $0x8] sm:$0xf]
    %v63 = vld [vmem:[%s5 + $0xc] sm:$0xf]
    %v64 = vld [vmem:[%s5 + $0x10] sm:$0xf]
    %v65 = vld [vmem:[%s5 + $0x14] sm:$0xf]
    %v66 = vld [vmem:[%s5 + $0x18] sm:$0xf]
    %v67 = vld [vmem:[%s5 + $0x1c] sm:$0xf]
    %v68 = vld [vmem:[%s4] sm:$0x1]
    %v69 = vld [vmem:[#allocation5] sm:$0xff]
    %v70 = vld [vmem:[%s0] sm:$0xf]
    %v71 = vld [vmem:[%s0 + $0x4] sm:$0xf]
    %v72 = vld [vmem:[%s3] sm:$0xf]
    %v73 = vld [vmem:[%s3 + $0x4] sm:$0xf]
    %v74 = vld [vmem:[%s3 + $0x8] sm:$0xf]
    %v75 = vld [vmem:[%s3 + $0xc] sm:$0xf]
    %v78 = vunpack.c.l.b16 %v70
    %v79 = vunpack.c.l.b16 %v71
    %v80 = vpack.c.b16 %v79, %v78
    %v85 = vunpack.c.l.b16 %v72
    %v86 = vunpack.c.l.b16 %v73
    %v87 = vunpack.c.l.b16 %v74
    %v88 = vunpack.c.l.b16 %v75
    %v89 = vpack.c.b16 %v86, %v85
    %v90 = vpack.c.b16 %v88, %v87
    %vm93 = vcmask 261120
    %v95 = vsel %vm93, %v80, 0
    %97 = vmatprep.subr.bf16.mxu0 0
    %98 = vmatpush1.bf16.msra.mxu0 0
    %99 = vmatprep.subr.bf16.mxu0 0
    %100 = vmatpush1.bf16.msra.mxu0 0
    %101 = vmatprep.subr.bf16.mxu0 0
    %102 = vmatpush1.bf16.msra.mxu0 0
    %103 = vmatprep.subr.bf16.mxu0 0
    %104 = vmatpush1.bf16.msra.mxu0 0
    %105 = vmatprep.subr.bf16.mxu0 0
    %106 = vmatpush1.bf16.msra.mxu0 0
    %107 = vmatprep.subr.bf16.mxu0 0
    %108 = vmatpush1.bf16.msra.mxu0 0
    %109 = vmatprep.subr.bf16.mxu0 0
    %110 = vmatpush1.bf16.msra.mxu0 %v90
    %111 = vmatprep.subr.bf16.mxu0 0
    %112 = vmatpush1.bf16.msra.mxu0 %v89
    %113 = vmatprep.subr.bf16.mxu0 0
    %114 = vmatpush2.bf16.msra.mxu0 0
    %115 = vmatprep.subr.bf16.mxu0 0
    %116 = vmatpush2.bf16.msra.mxu0 0
    %117 = vmatprep.subr.bf16.mxu0 0
    %118 = vmatpush2.bf16.msra.mxu0 0
    %119 = vmatprep.subr.bf16.mxu0 0
    %120 = vmatpush2.bf16.msra.mxu0 0
    %121 = vmatprep.subr.bf16.mxu0 0
    %122 = vmatpush2.bf16.msra.mxu0 0
    %123 = vmatprep.subr.bf16.mxu0 0
    %124 = vmatpush2.bf16.msra.mxu0 0
    %125 = vmatprep.subr.bf16.mxu0 0
    %126 = vmatpush2.bf16.msra.mxu0 0
    %127 = vmatprep.subr.bf16.mxu0 0
    %128 = vmatpush2.bf16.msra.mxu0 0
    %129 = vmatprep.mubr.bf16.mxu0 0
    %130 = vmatmul.mubr.bf16.gmra.mxu0 %v95
    %v131 = vpop.f32.mrf.mxu0
    %v132 = vadd.f32 0.0, %v131
    %v133 = vpop.f32.mrf.mxu0
    %v134 = vpop.f32.mrf.mxu0
    %v135 = vadd.f32 0.0, %v134
    %v136 = vpop.f32.mrf.mxu0
    %137 = vdwg.mxu0
    %v138 = vpack.c.bf16 %v135, %v132
    %v147 = vunpack.c.l.b16 %v60
    %v148 = vunpack.c.l.b16 %v61
    %v149 = vunpack.c.l.b16 %v62
    %v150 = vunpack.c.l.b16 %v63
    %v151 = vunpack.c.l.b16 %v64
    %v152 = vunpack.c.l.b16 %v65
    %v153 = vunpack.c.l.b16 %v66
    %v154 = vunpack.c.l.b16 %v67
    %v155 = vpack.c.b16 %v148, %v147
    %v156 = vpack.c.b16 %v150, %v149
    %v157 = vpack.c.b16 %v152, %v151
    %v158 = vpack.c.b16 %v154, %v153
    %v163 = vmul.bf16 %v138, %v155
    %v164 = vmul.bf16 %v138, %v156
    %v165 = vmul.bf16 %v138, %v157
    %v166 = vmul.bf16 %v138, %v158
    %v168 = vsel %vm93, %v68, 0
    %v171 = vsel %vm93, %v163, 0
    %v174 = vsel %vm93, %v164, 0
    %v177 = vsel %vm93, %v165, 0
    %v180 = vsel %vm93, %v166, 0
    %182 = vmatprep.subr.bf16.mxu0 0
    %183 = vmatpush1.bf16.xpose.msra.mxu0 0
    %184 = vmatprep.subr.bf16.mxu0 0
    %185 = vmatpush1.bf16.xpose.msra.mxu0 0
    %186 = vmatprep.subr.bf16.mxu0 0
    %187 = vmatpush1.bf16.xpose.msra.mxu0 0
    %188 = vmatprep.subr.bf16.mxu0 0
    %189 = vmatpush1.bf16.xpose.msra.mxu0 0
    %190 = vmatprep.subr.bf16.mxu0 0
    %191 = vmatpush1.bf16.xpose.msra.mxu0 %v180
    %192 = vmatprep.subr.bf16.mxu0 0
    %193 = vmatpush1.bf16.xpose.msra.mxu0 %v177
    %194 = vmatprep.subr.bf16.mxu0 0
    %195 = vmatpush1.bf16.xpose.msra.mxu0 %v174
    %196 = vmatprep.subr.bf16.mxu0 0
    %197 = vmatpush1.bf16.xpose.msra.mxu0 %v171
    %198 = vmatprep.subr.bf16.mxu0 0
    %199 = vmatpush2.bf16.xpose.msra.mxu0 0
    %200 = vmatprep.subr.bf16.mxu0 0
    %201 = vmatpush2.bf16.xpose.msra.mxu0 0
    %202 = vmatprep.subr.bf16.mxu0 0
    %203 = vmatpush2.bf16.xpose.msra.mxu0 0
    %204 = vmatprep.subr.bf16.mxu0 0
    %205 = vmatpush2.bf16.xpose.msra.mxu0 0
    %206 = vmatprep.subr.bf16.mxu0 0
    %207 = vmatpush2.bf16.xpose.msra.mxu0 0
    %208 = vmatprep.subr.bf16.mxu0 0
    %209 = vmatpush2.bf16.xpose.msra.mxu0 0
    %210 = vmatprep.subr.bf16.mxu0 0
    %211 = vmatpush2.bf16.xpose.msra.mxu0 0
    %212 = vmatprep.subr.bf16.mxu0 0
    %213 = vmatpush2.bf16.xpose.msra.mxu0 0
    %214 = vmatprep.mubr.bf16.mxu0 0
    %215 = vmatmul.mubr.bf16.gmra.mxu0 %v168
    %v216 = vpop.f32.mrf.mxu0
    %v217 = vadd.f32 0.0, %v216
    %v218 = vpop.f32.mrf.mxu0
    %v219 = vpop.f32.mrf.mxu0
    %v220 = vpop.f32.mrf.mxu0
    %221 = vdwg.mxu0
    %v222 = vlaneseq
    %v223 = vshrl.u32 %v222, 7
    %v224 = vsub.s32 0, %v223
    %v225 = vrot.slane %v217, %v224
    %227 = vrot.lane.b32.xlu0 %v225, 32
    %v228 = vpop.permute.xlu0 %227
    %v230 = vadd.f32 %v132, %v228
    %v231 = vadd.f32 %v135, %v228
    %v232 = vmul.f32 %v230, 0.2
    %v233 = vmul.f32 %v231, 0.2
    %v234 = vmax.f32 %v230, %v232
    %v235 = vmax.f32 %v231, %v233
    %vm236 = vcmask 785664
    %v237 = vsel %vm236, %v234, -inf
    %238 = vmax.xlane.f32.xlu0 %v237
    %v239 = vpop.xlane.xlu0 %238
    %v240 = vsel %vm236, %v235, -inf
    %241 = vmax.xlane.f32.xlu0 %v240
    %v242 = vpop.xlane.xlu0 %241
    %v243 = vsub.f32 %v234, %v239
    %v244 = vsub.f32 %v235, %v242
    %v245 = vmul.f32 %v243, 1.442695
    %v246 = vpow.pop %v245
    %v247 = vmul.f32 %v244, 1.442695
    %v248 = vpow.pop %v247
    %v249 = vunpack.c.l.bf16 %v58
    %v250 = vunpack.c.l.bf16 %v59
    %253 = vrot.lane.b32.xlu0 %v249, 32
    %v254 = vpop.permute.xlu0 %253
    %255 = vrot.lane.b32.xlu0 %v250, 32
    %v256 = vpop.permute.xlu0 %255
    %v259 = vmul.f32 %v246, %v254
    %v260 = vmul.f32 %v248, %v256
    %v261 = vpack.c.bf16 %v260, %v259
    %263 = vrot.lane.b32.xlu0 %v261, 96
    %v264 = vpop.permute.xlu0 %263
    %vm265 = vcmask 523264
    %v267 = vsel %vm265, %v264, 0
    %269 = vmatprep.subr.bf16.mxu0 0
    %270 = vmatpush1.bf16.msra.mxu0 0
    %271 = vmatprep.subr.bf16.mxu0 0
    %272 = vmatpush1.bf16.msra.mxu0 0
    %273 = vmatprep.subr.bf16.mxu0 0
    %274 = vmatpush1.bf16.msra.mxu0 0
    %275 = vmatprep.subr.bf16.mxu0 0
    %276 = vmatpush1.bf16.msra.mxu0 0
    %277 = vmatprep.subr.bf16.mxu0 0
    %278 = vmatpush1.bf16.msra.mxu0 %v166
    %279 = vmatprep.subr.bf16.mxu0 0
    %280 = vmatpush1.bf16.msra.mxu0 %v165
    %281 = vmatprep.subr.bf16.mxu0 0
    %282 = vmatpush1.bf16.msra.mxu0 %v164
    %283 = vmatprep.subr.bf16.mxu0 0
    %284 = vmatpush1.bf16.msra.mxu0 %v163
    %285 = vmatprep.subr.bf16.mxu0 0
    %286 = vmatpush2.bf16.msra.mxu0 0
    %287 = vmatprep.subr.bf16.mxu0 0
    %288 = vmatpush2.bf16.msra.mxu0 0
    %289 = vmatprep.subr.bf16.mxu0 0
    %290 = vmatpush2.bf16.msra.mxu0 0
    %291 = vmatprep.subr.bf16.mxu0 0
    %292 = vmatpush2.bf16.msra.mxu0 0
    %293 = vmatprep.subr.bf16.mxu0 0
    %294 = vmatpush2.bf16.msra.mxu0 0
    %295 = vmatprep.subr.bf16.mxu0 0
    %296 = vmatpush2.bf16.msra.mxu0 0
    %297 = vmatprep.subr.bf16.mxu0 0
    %298 = vmatpush2.bf16.msra.mxu0 0
    %299 = vmatprep.subr.bf16.mxu0 0
    %300 = vmatpush2.bf16.msra.mxu0 0
    %301 = vmatprep.mubr.bf16.mxu0 0
    %302 = vmatmul.mubr.bf16.gmra.mxu0 %v267
    %v303 = vpop.f32.mrf.mxu0
    %v304 = vadd.f32 0.0, %v303
    %v305 = vpop.f32.mrf.mxu0
    %v306 = vpop.f32.mrf.mxu0
    %v307 = vadd.f32 0.0, %v306
    %v308 = vpop.f32.mrf.mxu0
    %309 = vdwg.mxu0
    %310 = vmatprep.subr.bf16.mxu0 0
    %311 = vmatpush1.bf16.msra.mxu0 0
    %312 = vmatprep.subr.bf16.mxu0 0
    %313 = vmatpush1.bf16.msra.mxu0 0
    %314 = vmatprep.subr.bf16.mxu0 0
    %315 = vmatpush1.bf16.msra.mxu0 0
    %316 = vmatprep.subr.bf16.mxu0 0
    %317 = vmatpush1.bf16.msra.mxu0 0
    %318 = vmatprep.subr.bf16.mxu0 0
    %319 = vmatpush1.bf16.msra.mxu0 %v158
    %320 = vmatprep.subr.bf16.mxu0 0
    %321 = vmatpush1.bf16.msra.mxu0 %v157
    %322 = vmatprep.subr.bf16.mxu0 0
    %323 = vmatpush1.bf16.msra.mxu0 %v156
    %324 = vmatprep.subr.bf16.mxu0 0
    %325 = vmatpush1.bf16.msra.mxu0 %v155
    %326 = vmatprep.subr.bf16.mxu0 0
    %327 = vmatpush2.bf16.msra.mxu0 0
    %328 = vmatprep.subr.bf16.mxu0 0
    %329 = vmatpush2.bf16.msra.mxu0 0
    %330 = vmatprep.subr.bf16.mxu0 0
    %331 = vmatpush2.bf16.msra.mxu0 0
    %332 = vmatprep.subr.bf16.mxu0 0
    %333 = vmatpush2.bf16.msra.mxu0 0
    %334 = vmatprep.subr.bf16.mxu0 0
    %335 = vmatpush2.bf16.msra.mxu0 0
    %336 = vmatprep.subr.bf16.mxu0 0
    %337 = vmatpush2.bf16.msra.mxu0 0
    %338 = vmatprep.subr.bf16.mxu0 0
    %339 = vmatpush2.bf16.msra.mxu0 0
    %340 = vmatprep.subr.bf16.mxu0 0
    %341 = vmatpush2.bf16.msra.mxu0 0
    %342 = vmatprep.mubr.bf16.mxu0 0
    %343 = vmatmul.mubr.bf16.gmra.mxu0 %v267
    %v344 = vpop.f32.mrf.mxu0
    %v345 = vadd.f32 0.0, %v344
    %v346 = vpop.f32.mrf.mxu0
    %v347 = vpop.f32.mrf.mxu0
    %v348 = vadd.f32 0.0, %v347
    %v349 = vpop.f32.mrf.mxu0
    %350 = vdwg.mxu0
    %v351 = vmax.f32 %v345, 1e-12
    %v352 = vmax.f32 %v348, 1e-12
    %v353 = vrcp.pop %v351
    %v354 = vrcp.pop %v352
    %v355 = vmul.f32 %v304, %v353
    %v356 = vmul.f32 %v307, %v354
    %v357 = vlaneseq
    %v358 = vshrl.u32 %v357, 7
    %v359 = vsub.s32 0, %v358
    %v360 = vrot.slane %v69, %v359
    %v361 = vadd.f32 %v355, %v360
    %v362 = vadd.f32 %v356, %v360
    %v363 = vmax.f32 %v361, 0.0
    %v364 = vmax.f32 %v362, 0.0
    %v365 = vlaneseq
    %v366 = vshrl.u32 %v365, 7
    %v367 = vsub.s32 1, %v366
    %v368 = vrot.slane %v69, %v367
    %v369 = vmul.f32 %v363, %v368
    %v370 = vmul.f32 %v364, %v368
    %v371 = vlaneseq
    %v372 = vshrl.u32 %v371, 7
    %v373 = vsub.s32 2, %v372
    %v374 = vrot.slane %v69, %v373
    %v375 = vadd.f32 %v369, %v374
    %v376 = vadd.f32 %v370, %v374
    %v377 = vpack.c.bf16 %v376, %v375
    %s378 = scalar_lea.vmem %s3, 16
    %v379 = vld [vmem:[%s378] sm:$0xf]
    %v380 = vld [vmem:[%s378 + $0x4] sm:$0xf]
    %v381 = vld [vmem:[%s378 + $0x8] sm:$0xf]
    %v382 = vld [vmem:[%s378 + $0xc] sm:$0xf]
    %v387 = vunpack.c.l.b16 %v379
    %v388 = vunpack.c.l.b16 %v380
    %v389 = vunpack.c.l.b16 %v381
    %v390 = vunpack.c.l.b16 %v382
    %v391 = vpack.c.b16 %v388, %v387
    %v392 = vpack.c.b16 %v390, %v389
    %v396 = vsel %vm93, %v377, 0
    %398 = vmatprep.subr.bf16.mxu0 0
    %399 = vmatpush1.bf16.msra.mxu0 0
    %400 = vmatprep.subr.bf16.mxu0 0
    %401 = vmatpush1.bf16.msra.mxu0 0
    %402 = vmatprep.subr.bf16.mxu0 0
    %403 = vmatpush1.bf16.msra.mxu0 0
    %404 = vmatprep.subr.bf16.mxu0 0
    %405 = vmatpush1.bf16.msra.mxu0 0
    %406 = vmatprep.subr.bf16.mxu0 0
    %407 = vmatpush1.bf16.msra.mxu0 0
    %408 = vmatprep.subr.bf16.mxu0 0
    %409 = vmatpush1.bf16.msra.mxu0 0
    %410 = vmatprep.subr.bf16.mxu0 0
    %411 = vmatpush1.bf16.msra.mxu0 %v392
    %412 = vmatprep.subr.bf16.mxu0 0
    %413 = vmatpush1.bf16.msra.mxu0 %v391
    %414 = vmatprep.subr.bf16.mxu0 0
    %415 = vmatpush2.bf16.msra.mxu0 0
    %416 = vmatprep.subr.bf16.mxu0 0
    %417 = vmatpush2.bf16.msra.mxu0 0
    %418 = vmatprep.subr.bf16.mxu0 0
    %419 = vmatpush2.bf16.msra.mxu0 0
    %420 = vmatprep.subr.bf16.mxu0 0
    %421 = vmatpush2.bf16.msra.mxu0 0
    %422 = vmatprep.subr.bf16.mxu0 0
    %423 = vmatpush2.bf16.msra.mxu0 0
    %424 = vmatprep.subr.bf16.mxu0 0
    %425 = vmatpush2.bf16.msra.mxu0 0
    %426 = vmatprep.subr.bf16.mxu0 0
    %427 = vmatpush2.bf16.msra.mxu0 0
    %428 = vmatprep.subr.bf16.mxu0 0
    %429 = vmatpush2.bf16.msra.mxu0 0
    %430 = vmatprep.mubr.bf16.mxu0 0
    %431 = vmatmul.mubr.bf16.gmra.mxu0 %v396
    %v432 = vpop.f32.mrf.mxu0
    %v433 = vadd.f32 0.0, %v432
    %v434 = vpop.f32.mrf.mxu0
    %v435 = vpop.f32.mrf.mxu0
    %v436 = vadd.f32 0.0, %v435
    %v437 = vpop.f32.mrf.mxu0
    %438 = vdwg.mxu0
    %v439 = vpack.c.bf16 %v436, %v433
    %v440 = vmul.bf16 %v439, %v155
    %v441 = vmul.bf16 %v439, %v156
    %v442 = vmul.bf16 %v439, %v157
    %v443 = vmul.bf16 %v439, %v158
    %v446 = vunpack.c.l.s4 1966171168
    %v447 = vunpack.c.0.s8 %v446
    %v448 = vlaneseq
    %v449 = vshrl.u32 %v448, 7
    %v450 = vsub.s32 %v447, %v449
    %v451 = vrot.slane %v68, %v450
    %v453 = vunpack.c.l.s4 1966171168
    %v454 = vunpack.c.0.s8 %v453
    %v455 = vlaneseq
    %v456 = vshrl.u32 %v455, 7
    %v457 = vsub.s32 %v454, %v456
    %v458 = vrot.slane %v451, %v457
    %v460 = vshrl.u32 %v458, 16
    %v463 = vsel %vm93, %v460, 0
    %v466 = vsel %vm93, %v440, 0
    %v469 = vsel %vm93, %v441, 0
    %v472 = vsel %vm93, %v442, 0
    %v475 = vsel %vm93, %v443, 0
    %477 = vmatprep.subr.bf16.mxu0 0
    %478 = vmatpush1.bf16.xpose.msra.mxu0 0
    %479 = vmatprep.subr.bf16.mxu0 0
    %480 = vmatpush1.bf16.xpose.msra.mxu0 0
    %481 = vmatprep.subr.bf16.mxu0 0
    %482 = vmatpush1.bf16.xpose.msra.mxu0 0
    %483 = vmatprep.subr.bf16.mxu0 0
    %484 = vmatpush1.bf16.xpose.msra.mxu0 0
    %485 = vmatprep.subr.bf16.mxu0 0
    %486 = vmatpush1.bf16.xpose.msra.mxu0 %v475
    %487 = vmatprep.subr.bf16.mxu0 0
    %488 = vmatpush1.bf16.xpose.msra.mxu0 %v472
    %489 = vmatprep.subr.bf16.mxu0 0
    %490 = vmatpush1.bf16.xpose.msra.mxu0 %v469
    %491 = vmatprep.subr.bf16.mxu0 0
    %492 = vmatpush1.bf16.xpose.msra.mxu0 %v466
    %493 = vmatprep.subr.bf16.mxu0 0
    %494 = vmatpush2.bf16.xpose.msra.mxu0 0
    %495 = vmatprep.subr.bf16.mxu0 0
    %496 = vmatpush2.bf16.xpose.msra.mxu0 0
    %497 = vmatprep.subr.bf16.mxu0 0
    %498 = vmatpush2.bf16.xpose.msra.mxu0 0
    %499 = vmatprep.subr.bf16.mxu0 0
    %500 = vmatpush2.bf16.xpose.msra.mxu0 0
    %501 = vmatprep.subr.bf16.mxu0 0
    %502 = vmatpush2.bf16.xpose.msra.mxu0 0
    %503 = vmatprep.subr.bf16.mxu0 0
    %504 = vmatpush2.bf16.xpose.msra.mxu0 0
    %505 = vmatprep.subr.bf16.mxu0 0
    %506 = vmatpush2.bf16.xpose.msra.mxu0 0
    %507 = vmatprep.subr.bf16.mxu0 0
    %508 = vmatpush2.bf16.xpose.msra.mxu0 0
    %509 = vmatprep.mubr.bf16.mxu0 0
    %510 = vmatmul.mubr.bf16.gmra.mxu0 %v463
    %v511 = vpop.f32.mrf.mxu0
    %v512 = vadd.f32 0.0, %v511
    %v513 = vpop.f32.mrf.mxu0
    %v514 = vpop.f32.mrf.mxu0
    %v515 = vpop.f32.mrf.mxu0
    %516 = vdwg.mxu0
    %v517 = vlaneseq
    %v518 = vshrl.u32 %v517, 7
    %v519 = vsub.s32 0, %v518
    %v520 = vrot.slane %v512, %v519
    %522 = vrot.lane.b32.xlu0 %v520, 32
    %v523 = vpop.permute.xlu0 %522
    %v525 = vadd.f32 %v433, %v523
    %v526 = vadd.f32 %v436, %v523
    %v527 = vmul.f32 %v525, 0.2
    %v528 = vmul.f32 %v526, 0.2
    %v529 = vmax.f32 %v525, %v527
    %v530 = vmax.f32 %v526, %v528
    %v531 = vsel %vm236, %v529, -inf
    %532 = vmax.xlane.f32.xlu0 %v531
    %v533 = vpop.xlane.xlu0 %532
    %v534 = vsel %vm236, %v530, -inf
    %535 = vmax.xlane.f32.xlu0 %v534
    %v536 = vpop.xlane.xlu0 %535
    %v537 = vsub.f32 %v529, %v533
    %v538 = vsub.f32 %v530, %v536
    %v539 = vmul.f32 %v537, 1.442695
    %v540 = vpow.pop %v539
    %v541 = vmul.f32 %v538, 1.442695
    %v542 = vpow.pop %v541
    %v543 = vmul.f32 %v540, %v254
    %v544 = vmul.f32 %v542, %v256
    %v545 = vpack.c.bf16 %v544, %v543
    %547 = vrot.lane.b32.xlu0 %v545, 96
    %v548 = vpop.permute.xlu0 %547
    %v550 = vsel %vm265, %v548, 0
    %552 = vmatprep.subr.bf16.mxu0 0
    %553 = vmatpush1.bf16.msra.mxu0 0
    %554 = vmatprep.subr.bf16.mxu0 0
    %555 = vmatpush1.bf16.msra.mxu0 0
    %556 = vmatprep.subr.bf16.mxu0 0
    %557 = vmatpush1.bf16.msra.mxu0 0
    %558 = vmatprep.subr.bf16.mxu0 0
    %559 = vmatpush1.bf16.msra.mxu0 0
    %560 = vmatprep.subr.bf16.mxu0 0
    %561 = vmatpush1.bf16.msra.mxu0 %v443
    %562 = vmatprep.subr.bf16.mxu0 0
    %563 = vmatpush1.bf16.msra.mxu0 %v442
    %564 = vmatprep.subr.bf16.mxu0 0
    %565 = vmatpush1.bf16.msra.mxu0 %v441
    %566 = vmatprep.subr.bf16.mxu0 0
    %567 = vmatpush1.bf16.msra.mxu0 %v440
    %568 = vmatprep.subr.bf16.mxu0 0
    %569 = vmatpush2.bf16.msra.mxu0 0
    %570 = vmatprep.subr.bf16.mxu0 0
    %571 = vmatpush2.bf16.msra.mxu0 0
    %572 = vmatprep.subr.bf16.mxu0 0
    %573 = vmatpush2.bf16.msra.mxu0 0
    %574 = vmatprep.subr.bf16.mxu0 0
    %575 = vmatpush2.bf16.msra.mxu0 0
    %576 = vmatprep.subr.bf16.mxu0 0
    %577 = vmatpush2.bf16.msra.mxu0 0
    %578 = vmatprep.subr.bf16.mxu0 0
    %579 = vmatpush2.bf16.msra.mxu0 0
    %580 = vmatprep.subr.bf16.mxu0 0
    %581 = vmatpush2.bf16.msra.mxu0 0
    %582 = vmatprep.subr.bf16.mxu0 0
    %583 = vmatpush2.bf16.msra.mxu0 0
    %584 = vmatprep.mubr.bf16.mxu0 0
    %585 = vmatmul.mubr.bf16.gmra.mxu0 %v550
    %v586 = vpop.f32.mrf.mxu0
    %v587 = vadd.f32 0.0, %v586
    %v588 = vpop.f32.mrf.mxu0
    %v589 = vpop.f32.mrf.mxu0
    %v590 = vadd.f32 0.0, %v589
    %v591 = vpop.f32.mrf.mxu0
    %592 = vdwg.mxu0
    %593 = vmatprep.subr.bf16.mxu0 0
    %594 = vmatpush1.bf16.msra.mxu0 0
    %595 = vmatprep.subr.bf16.mxu0 0
    %596 = vmatpush1.bf16.msra.mxu0 0
    %597 = vmatprep.subr.bf16.mxu0 0
    %598 = vmatpush1.bf16.msra.mxu0 0
    %599 = vmatprep.subr.bf16.mxu0 0
    %600 = vmatpush1.bf16.msra.mxu0 0
    %601 = vmatprep.subr.bf16.mxu0 0
    %602 = vmatpush1.bf16.msra.mxu0 %v158
    %603 = vmatprep.subr.bf16.mxu0 0
    %604 = vmatpush1.bf16.msra.mxu0 %v157
    %605 = vmatprep.subr.bf16.mxu0 0
    %606 = vmatpush1.bf16.msra.mxu0 %v156
    %607 = vmatprep.subr.bf16.mxu0 0
    %608 = vmatpush1.bf16.msra.mxu0 %v155
    %609 = vmatprep.subr.bf16.mxu0 0
    %610 = vmatpush2.bf16.msra.mxu0 0
    %611 = vmatprep.subr.bf16.mxu0 0
    %612 = vmatpush2.bf16.msra.mxu0 0
    %613 = vmatprep.subr.bf16.mxu0 0
    %614 = vmatpush2.bf16.msra.mxu0 0
    %615 = vmatprep.subr.bf16.mxu0 0
    %616 = vmatpush2.bf16.msra.mxu0 0
    %617 = vmatprep.subr.bf16.mxu0 0
    %618 = vmatpush2.bf16.msra.mxu0 0
    %619 = vmatprep.subr.bf16.mxu0 0
    %620 = vmatpush2.bf16.msra.mxu0 0
    %621 = vmatprep.subr.bf16.mxu0 0
    %622 = vmatpush2.bf16.msra.mxu0 0
    %623 = vmatprep.subr.bf16.mxu0 0
    %624 = vmatpush2.bf16.msra.mxu0 0
    %625 = vmatprep.mubr.bf16.mxu0 0
    %626 = vmatmul.mubr.bf16.gmra.mxu0 %v550
    %v627 = vpop.f32.mrf.mxu0
    %v628 = vadd.f32 0.0, %v627
    %v629 = vpop.f32.mrf.mxu0
    %v630 = vpop.f32.mrf.mxu0
    %v631 = vadd.f32 0.0, %v630
    %v632 = vpop.f32.mrf.mxu0
    %633 = vdwg.mxu0
    %v634 = vmax.f32 %v628, 1e-12
    %v635 = vmax.f32 %v631, 1e-12
    %v636 = vrcp.pop %v634
    %v637 = vrcp.pop %v635
    %v638 = vmul.f32 %v587, %v636
    %v639 = vmul.f32 %v590, %v637
    %v640 = vlaneseq
    %v641 = vshrl.u32 %v640, 7
    %v642 = vsub.s32 3, %v641
    %v643 = vrot.slane %v69, %v642
    %v644 = vadd.f32 %v638, %v643
    %v645 = vadd.f32 %v639, %v643
    %v646 = vmax.f32 %v644, 0.0
    %v647 = vmax.f32 %v645, 0.0
    %v648 = vlaneseq
    %v649 = vshrl.u32 %v648, 7
    %v650 = vsub.s32 4, %v649
    %v651 = vrot.slane %v69, %v650
    %v652 = vmul.f32 %v646, %v651
    %v653 = vmul.f32 %v647, %v651
    %v654 = vlaneseq
    %v655 = vshrl.u32 %v654, 7
    %v656 = vsub.s32 5, %v655
    %v657 = vrot.slane %v69, %v656
    %v658 = vadd.f32 %v652, %v657
    %v659 = vadd.f32 %v653, %v657
    %v660 = vld [vmem:[#allocation2] sm:$0xf]
    %v661 = vpack.c.bf16 %v659, %v658
    %vm662 = vcmask 130048
    %v664 = vsel %vm662, %v660, 0
    %666 = vmatprep.subr.bf16.mxu0 0
    %667 = vmatpush1.bf16.msra.mxu0 0
    %668 = vmatprep.subr.bf16.mxu0 0
    %669 = vmatpush1.bf16.msra.mxu0 0
    %670 = vmatprep.subr.bf16.mxu0 0
    %671 = vmatpush1.bf16.msra.mxu0 0
    %672 = vmatprep.subr.bf16.mxu0 0
    %673 = vmatpush1.bf16.msra.mxu0 0
    %674 = vmatprep.subr.bf16.mxu0 0
    %675 = vmatpush1.bf16.msra.mxu0 0
    %676 = vmatprep.subr.bf16.mxu0 0
    %677 = vmatpush1.bf16.msra.mxu0 0
    %678 = vmatprep.subr.bf16.mxu0 0
    %679 = vmatpush1.bf16.msra.mxu0 0
    %680 = vmatprep.subr.bf16.mxu0 0
    %681 = vmatpush1.bf16.msra.mxu0 %v661
    %682 = vmatprep.subr.bf16.mxu0 0
    %683 = vmatpush2.bf16.msra.mxu0 0
    %684 = vmatprep.subr.bf16.mxu0 0
    %685 = vmatpush2.bf16.msra.mxu0 0
    %686 = vmatprep.subr.bf16.mxu0 0
    %687 = vmatpush2.bf16.msra.mxu0 0
    %688 = vmatprep.subr.bf16.mxu0 0
    %689 = vmatpush2.bf16.msra.mxu0 0
    %690 = vmatprep.subr.bf16.mxu0 0
    %691 = vmatpush2.bf16.msra.mxu0 0
    %692 = vmatprep.subr.bf16.mxu0 0
    %693 = vmatpush2.bf16.msra.mxu0 0
    %694 = vmatprep.subr.bf16.mxu0 0
    %695 = vmatpush2.bf16.msra.mxu0 0
    %696 = vmatprep.subr.bf16.mxu0 0
    %697 = vmatpush2.bf16.msra.mxu0 0
    %698 = vmatprep.mubr.bf16.mxu0 0
    %699 = vmatmul.mubr.bf16.gmra.mxu0 %v664
    %v700 = vpop.f32.mrf.mxu0
    %v701 = vadd.f32 0.0, %v700
    %v702 = vpop.f32.mrf.mxu0
    %v703 = vpop.f32.mrf.mxu0
    %v704 = vpop.f32.mrf.mxu0
    %705 = vdwg.mxu0
    %v706 = vpack.c.bf16 %v701, %v701
    %v707 = vld [vmem:[%s6] sm:$0xf]
    %v708 = vld [vmem:[%s6 + $0x4] sm:$0xf]
    %v709 = vld [vmem:[%s6 + $0x8] sm:$0xf]
    %v710 = vld [vmem:[%s6 + $0xc] sm:$0xf]
    %v711 = vlaneseq
    %v712 = vshrl.u32 %v711, 7
    %v713 = vsub.s32 6, %v712
    %v714 = vrot.slane %v69, %v713
    %v719 = vunpack.c.l.b16 %v707
    %v720 = vunpack.c.l.b16 %v708
    %v721 = vunpack.c.l.b16 %v709
    %v722 = vunpack.c.l.b16 %v710
    %v723 = vpack.c.b16 %v720, %v719
    %v724 = vpack.c.b16 %v722, %v721
    %v728 = vsel %vm93, %v706, 0
    %730 = vmatprep.subr.bf16.mxu0 0
    %731 = vmatpush1.bf16.msra.mxu0 0
    %732 = vmatprep.subr.bf16.mxu0 0
    %733 = vmatpush1.bf16.msra.mxu0 0
    %734 = vmatprep.subr.bf16.mxu0 0
    %735 = vmatpush1.bf16.msra.mxu0 0
    %736 = vmatprep.subr.bf16.mxu0 0
    %737 = vmatpush1.bf16.msra.mxu0 0
    %738 = vmatprep.subr.bf16.mxu0 0
    %739 = vmatpush1.bf16.msra.mxu0 0
    %740 = vmatprep.subr.bf16.mxu0 0
    %741 = vmatpush1.bf16.msra.mxu0 0
    %742 = vmatprep.subr.bf16.mxu0 0
    %743 = vmatpush1.bf16.msra.mxu0 %v724
    %744 = vmatprep.subr.bf16.mxu0 0
    %745 = vmatpush1.bf16.msra.mxu0 %v723
    %746 = vmatprep.subr.bf16.mxu0 0
    %747 = vmatpush2.bf16.msra.mxu0 0
    %748 = vmatprep.subr.bf16.mxu0 0
    %749 = vmatpush2.bf16.msra.mxu0 0
    %750 = vmatprep.subr.bf16.mxu0 0
    %751 = vmatpush2.bf16.msra.mxu0 0
    %752 = vmatprep.subr.bf16.mxu0 0
    %753 = vmatpush2.bf16.msra.mxu0 0
    %754 = vmatprep.subr.bf16.mxu0 0
    %755 = vmatpush2.bf16.msra.mxu0 0
    %756 = vmatprep.subr.bf16.mxu0 0
    %757 = vmatpush2.bf16.msra.mxu0 0
    %758 = vmatprep.subr.bf16.mxu0 0
    %759 = vmatpush2.bf16.msra.mxu0 0
    %760 = vmatprep.subr.bf16.mxu0 0
    %761 = vmatpush2.bf16.msra.mxu0 0
    %762 = vmatprep.mubr.bf16.mxu0 0
    %763 = vmatmul.mubr.bf16.gmra.mxu0 %v728
    %v764 = vpop.f32.mrf.mxu0
    %v765 = vadd.f32 %v714, %v764
    %v766 = vpop.f32.mrf.mxu0
    %v767 = vpop.f32.mrf.mxu0
    %v768 = vpop.f32.mrf.mxu0
    %769 = vdwg.mxu0
    %v770 = vmax.f32 %v765, 0.0
    %v771 = vpack.c.bf16 %v770, %v770
    %v772 = vld [vmem:[%s7] sm:$0xf]
    %v773 = vld [vmem:[%s7 + $0x4] sm:$0xf]
    %v774 = vlaneseq
    %v775 = vshrl.u32 %v774, 7
    %v776 = vsub.s32 7, %v775
    %v777 = vrot.slane %v69, %v776
    %v780 = vunpack.c.l.b16 %v772
    %v781 = vunpack.c.l.b16 %v773
    %v782 = vpack.c.b16 %v781, %v780
    %v785 = vsel %vm662, %v771, 0
    %787 = vmatprep.subr.bf16.mxu0 0
    %788 = vmatpush1.bf16.msra.mxu0 0
    %789 = vmatprep.subr.bf16.mxu0 0
    %790 = vmatpush1.bf16.msra.mxu0 0
    %791 = vmatprep.subr.bf16.mxu0 0
    %792 = vmatpush1.bf16.msra.mxu0 0
    %793 = vmatprep.subr.bf16.mxu0 0
    %794 = vmatpush1.bf16.msra.mxu0 0
    %795 = vmatprep.subr.bf16.mxu0 0
    %796 = vmatpush1.bf16.msra.mxu0 0
    %797 = vmatprep.subr.bf16.mxu0 0
    %798 = vmatpush1.bf16.msra.mxu0 0
    %799 = vmatprep.subr.bf16.mxu0 0
    %800 = vmatpush1.bf16.msra.mxu0 0
    %801 = vmatprep.subr.bf16.mxu0 0
    %802 = vmatpush1.bf16.msra.mxu0 %v782
    %803 = vmatprep.subr.bf16.mxu0 0
    %804 = vmatpush2.bf16.msra.mxu0 0
    %805 = vmatprep.subr.bf16.mxu0 0
    %806 = vmatpush2.bf16.msra.mxu0 0
    %807 = vmatprep.subr.bf16.mxu0 0
    %808 = vmatpush2.bf16.msra.mxu0 0
    %809 = vmatprep.subr.bf16.mxu0 0
    %810 = vmatpush2.bf16.msra.mxu0 0
    %811 = vmatprep.subr.bf16.mxu0 0
    %812 = vmatpush2.bf16.msra.mxu0 0
    %813 = vmatprep.subr.bf16.mxu0 0
    %814 = vmatpush2.bf16.msra.mxu0 0
    %815 = vmatprep.subr.bf16.mxu0 0
    %816 = vmatpush2.bf16.msra.mxu0 0
    %817 = vmatprep.subr.bf16.mxu0 0
    %818 = vmatpush2.bf16.msra.mxu0 0
    %819 = vmatprep.mubr.bf16.mxu0 0
    %820 = vmatmul.mubr.bf16.gmra.mxu0 %v785
    %v821 = vpop.f32.mrf.mxu0
    %v822 = vadd.f32 %v777, %v821
    %v823 = vpop.f32.mrf.mxu0
    %v824 = vpop.f32.mrf.mxu0
    %v825 = vpop.f32.mrf.mxu0
    %826 = vdwg.mxu0
    %827 = vst [vmem:[#allocation7] sm:$0xff] %v822
    // Predicated region
    $region46: #{tpu_custom_call.1} parent=1 // pred_check
      _
    $region47: #{tpu_custom_call.1} parent=1 // pred_check_branch
      %829 = sbr.rel (0) target = $region49
    $region48: #{tpu_custom_call.1} parent=1 // pred_region
      %s831 = ssub.s32 128, 128
      %832 = vsyncadd [#allocation4], %s831
      %s834 = sshll.u32 [#allocation7], 4
      %s835 = int_to_ptr.vmem [resolvable:$true] %s834
      %837 = dma.vmem_to_hbm [thread:$0]  %s835, 128, %s9, [#allocation4]
    $region49: #{tpu_custom_call.1} parent=1 // pred_fallthru
      _
    // Predicated region
    $region50: #{tpu_custom_call.1} parent=1 // pred_check
      _
    $region51: #{tpu_custom_call.1} parent=1 // pred_check_branch
      %839 = sbr.rel (0) target = $region53
    $region52: #{tpu_custom_call.1} parent=1 // pred_region
      %840 = dma.done [#allocation4], 128
    $region53: #{tpu_custom_call.1} parent=1 // pred_fallthru
      _
    %841 = vsyncpa [#allocation3], 1
    %842 = vsyncpa [#allocation6], 1
    %843 = vsyncpa [#allocation4], 1

</llo_original>
